<compile_context>
chip_gen: v7x
topology: tpu7x:2x2x1
jax: 0.10.0
libtpu: 0.0.40
codegen_flags: <defaults>
</compile_context>

<pallas_src>
import functools

import jax
import jax.numpy as jnp
from jax.experimental import pallas as pl
from jax.experimental.pallas import tpu as pltpu

EPS = 1e-5
# Conservative budgets so the same code path is portable to v7x
# (64 MiB physical / 32 MiB scoped); v5e/v6e (128 MiB) have more headroom.
_VMEM_BUDGET = 20 * 1024 * 1024
_VMEM_LIMIT = 32 * 1024 * 1024


def _fused_kernel(x_ref, w_ref, g_ref, b_ref, o_ref, *, count):
    """Single-dispatch path: whole problem resident in VMEM.

    x_ref: (N, C, HW)  activations, spatial on the lane axis
    w_ref: (C, C)      conv weight with the sigmoid gate folded in (W * g^T)
    g_ref/b_ref: (C,1) BN affine
    o_ref: (N, C, HW)  output; also serves as the VMEM scratch holding y
    """
    n, c, _ = x_ref.shape
    y_sum = jnp.zeros((c, 1), jnp.float32)
    y_sumsq = jnp.zeros((c, 1), jnp.float32)
    for i in range(n):  # N is small & static -> unrolled
        y = jnp.dot(w_ref[...], x_ref[i], preferred_element_type=jnp.float32)
        o_ref[i] = y
        y_sum = y_sum + jnp.sum(y, axis=1, keepdims=True)
        y_sumsq = y_sumsq + jnp.sum(y * y, axis=1, keepdims=True)
    inv_m = 1.0 / count
    mean = y_sum * inv_m
    # Biased variance (training-mode BN); clamp guards f32 cancellation.
    var = jnp.maximum(y_sumsq * inv_m - mean * mean, 0.0)
    scale = g_ref[...] * jax.lax.rsqrt(var + EPS)       # (C, 1)
    shift = b_ref[...] - mean * scale
    for i in range(n):
        o_ref[i] = o_ref[i] * scale + shift             # lane-dense store


def _stats_kernel(x_ref, w_ref, sum_ref, sumsq_ref):
    """Fallback pass 1: per-N partial sum / sum-of-squares of y = W' @ x."""
    @pl.when(pl.program_id(1) == 0)
    def _():
        sum_ref[...] = jnp.zeros_like(sum_ref)
        sumsq_ref[...] = jnp.zeros_like(sumsq_ref)

    y = jnp.dot(w_ref[...], x_ref[0], preferred_element_type=jnp.float32)
    sum_ref[0] += jnp.sum(y, axis=1, keepdims=True)
    sumsq_ref[0] += jnp.sum(y * y, axis=1, keepdims=True)


def _norm_kernel(x_ref, w_ref, shift_ref, o_ref):
    """Fallback pass 2: y = (scale*W') @ x + shift, lane-dense store."""
    o_ref[0] = (jnp.dot(w_ref[...], x_ref[0], preferred_element_type=jnp.float32)
                + shift_ref[...])


def _pick_tile_hw(hw, cap=8192):
    """Largest lane-dense (multiple-of-128) divisor of hw up to `cap`,
    falling back to a single full-extent block (always legal)."""
    if hw <= cap:
        return hw
    if hw % 128 != 0:
        # TODO(synk): for very large non-lane-aligned HW, pad to a multiple of
        # 128 (masking padded lanes out of sum/sumsq/count); full-extent is
        # correct but can pressure VMEM on v7x.
        return hw
    best = 128
    cand = 256
    while cand <= cap:
        if hw % cand == 0:
            best = cand
        cand += 128
    return best


def fused_sigmoid_mul_conv1x1_bn(x18, x22, conv_w, gamma, beta,
                                 *, force_two_pass=False):
    """x18: (N, C, H, W) f32; x22: (1, C, 1, 1); conv_w: (Cout, Cin, 1, 1)."""
    n, c, h, w = x18.shape
    hw = h * w
    m = n * hw

    x = x18.reshape(n, c, hw).astype(jnp.float32)       # free; stays NCHW-native
    # Fold the sigmoid gate into the conv weight: W @ (x*g) == (W * g^T) @ x.
    gate = jax.nn.sigmoid(x22.reshape(1, c).astype(jnp.float32))   # per-input-ch
    wmat = conv_w.reshape(c, c).astype(jnp.float32) * gate         # (Cout, Cin)
    g = gamma.reshape(c, 1).astype(jnp.float32)
    b = beta.reshape(c, 1).astype(jnp.float32)

    x_bytes = n * c * hw * 4
    fully_resident = (not force_two_pass) and (6 * x_bytes + (1 << 16) <= _VMEM_BUDGET)

    if fully_resident:
        # ---- single fused kernel: one dispatch, x read once ----------------
        full_spec = pl.BlockSpec((n, c, hw), lambda i: (0, 0, 0))
        w_spec = pl.BlockSpec((c, c), lambda i: (0, 0))
        cvec = pl.BlockSpec((c, 1), lambda i: (0, 0))
        out = pl.pallas_call(
            functools.partial(_fused_kernel, count=float(m)),
            out_shape=jax.ShapeDtypeStruct((n, c, hw), jnp.float32),
            grid_spec=pltpu.PrefetchScalarGridSpec(
                num_scalar_prefetch=0,
                grid=(1,),
                in_specs=[full_spec, w_spec, cvec, cvec],
                out_specs=full_spec),
            compiler_params=pltpu.CompilerParams(
                dimension_semantics=("arbitrary",),
                vmem_limit_bytes=_VMEM_LIMIT),
            cost_estimate=pl.CostEstimate(
                flops=2 * m * c * c + 6 * m * c,
                transcendentals=0,
                bytes_accessed=2 * m * c * 4 + c * c * 4 + 2 * c * 4),
        )(x, wmat, g, b)
        return out.reshape(n, c, h, w)

    # ---- fallback: two-pass, HBM-tiled (x does not fit VMEM) ---------------
    tile = _pick_tile_hw(hw)
    nt = hw // tile
    grid = (n, nt)

    x_spec = pl.BlockSpec((1, c, tile), lambda i, j: (i, 0, j))
    w_spec = pl.BlockSpec((c, c), lambda i, j: (0, 0))
    cvec = pl.BlockSpec((c, 1), lambda i, j: (0, 0))
    psum_spec = pl.BlockSpec((1, c, 1), lambda i, j: (i, 0, 0))

    # Pass 1: per-N partial sums so v7x's two TensorCores can both participate.
    p_sum, p_sumsq = pl.pallas_call(
        _stats_kernel,
        out_shape=(jax.ShapeDtypeStruct((n, c, 1), jnp.float32),
                   jax.ShapeDtypeStruct((n, c, 1), jnp.float32)),
        grid_spec=pltpu.PrefetchScalarGridSpec(
            num_scalar_prefetch=0,
            grid=grid,
            in_specs=[x_spec, w_spec],
            out_specs=[psum_spec, psum_spec]),
        compiler_params=pltpu.CompilerParams(
            dimension_semantics=("parallel", "arbitrary"),
            vmem_limit_bytes=_VMEM_LIMIT),
        cost_estimate=pl.CostEstimate(
            flops=2 * m * c * c + 4 * m * c,
            transcendentals=0,
            bytes_accessed=m * c * 4 + c * c * 4 + 2 * n * c * 4),
    )(x, wmat)

    # Tiny (C,) math stays in plain JAX; fold the BN scale into the weight so
    # pass 2 is just matmul + broadcast add.
    y_sum = jnp.sum(p_sum, axis=0)        # (C, 1)
    y_sumsq = jnp.sum(p_sumsq, axis=0)    # (C, 1)
    mean = y_sum / m
    var = jnp.maximum(y_sumsq / m - mean * mean, 0.0)
    scale = g * jax.lax.rsqrt(var + EPS)  # (C, 1)
    shift = b - mean * scale              # (C, 1)
    w_scaled = scale * wmat               # row-scale: scale*(W'@x) == (scale*W')@x

    out = pl.pallas_call(
        _norm_kernel,
        out_shape=jax.ShapeDtypeStruct((n, c, hw), jnp.float32),
        grid_spec=pltpu.PrefetchScalarGridSpec(
            num_scalar_prefetch=0,
            grid=grid,
            in_specs=[x_spec, w_spec, cvec],
            out_specs=x_spec),
        compiler_params=pltpu.CompilerParams(
            dimension_semantics=("parallel", "parallel"),
            vmem_limit_bytes=_VMEM_LIMIT),
        cost_estimate=pl.CostEstimate(
            flops=2 * m * c * c + 2 * m * c,
            transcendentals=0,
            bytes_accessed=2 * m * c * 4 + c * c * 4 + c * 4),
    )(x, w_scaled, shift)

    return out.reshape(n, c, h, w)


def _reference(x18, x22, conv_w, gamma, beta):
    x23 = jax.nn.sigmoid(x22)
    x24 = x18 * x23
    x25 = jax.lax.conv_general_dilated(
        x24, conv_w, window_strides=(1, 1), padding="VALID",
        dimension_numbers=("NCHW", "OIHW", "NCHW"))
    mean = jnp.mean(x25, axis=(0, 2, 3), keepdims=True)
    var = jnp.mean((x25 - mean) ** 2, axis=(0, 2, 3), keepdims=True)
    return ((x25 - mean) * jax.lax.rsqrt(var + EPS)
            * gamma.reshape(1, -1, 1, 1) + beta.reshape(1, -1, 1, 1))


if __name__ == "__main__":
    # Small shapes consistent with the module: C is fixed to 32 by Conv2d(32, 32).
    N, C, H, W = 2, 32, 16, 16
    key = jax.random.PRNGKey(0)
    k1, k2, k3 = jax.random.split(key, 3)

    x18 = jax.random.normal(k1, (N, C, H, W), dtype=jnp.float32)
    x22 = jax.random.normal(k2, (1, C, 1, 1), dtype=jnp.float32)
    # Deterministic synthetic parameters: conv weight ~ N(0, 1)*0.1,
    # batchnorm affine at PyTorch defaults (gamma=1, beta=0).
    conv_w = 0.1 * jax.random.normal(k3, (C, C, 1, 1), dtype=jnp.float32)
    gamma = jnp.ones((C,), dtype=jnp.float32)
    beta = jnp.zeros((C,), dtype=jnp.float32)

    ref = jax.block_until_ready(_reference(x18, x22, conv_w, gamma, beta))

    # Fully-fused single-dispatch path (the one taken for the module's shapes).
    out = fused_sigmoid_mul_conv1x1_bn(x18, x22, conv_w, gamma, beta)
    out = jax.block_until_ready(out)
    assert out.shape == (N, C, H, W)
    assert jnp.max(jnp.abs(out - ref)) < 1e-4, "fused-path mismatch vs reference"

    # Also exercise the two-pass fallback (large-x) path for coverage.
    out2 = fused_sigmoid_mul_conv1x1_bn(x18, x22, conv_w, gamma, beta,
                                        force_two_pass=True)
    out2 = jax.block_until_ready(out2)
    assert jnp.max(jnp.abs(out2 - ref)) < 1e-4, "two-pass-path mismatch vs reference"

    print("KERNEL_OK")
</pallas_src>

<mosaic_0001>
module attributes {stable_mosaic.version = 11 : i64} {
  func.func @_fused_kernel(%arg0: i32, %arg1: memref<2x32x256xf32, #tpu.memory_space<vmem>>, %arg2: memref<32x32xf32, #tpu.memory_space<vmem>>, %arg3: memref<32x1xf32, #tpu.memory_space<vmem>>, %arg4: memref<32x1xf32, #tpu.memory_space<vmem>>, %arg5: memref<2x32x256xf32, #tpu.memory_space<vmem>>) attributes {dimension_semantics = [#tpu.dimension_semantics<arbitrary>], iteration_bounds = array<i64: 1>, scalar_prefetch = 0 : i64, scratch_operands = 0 : i64, tpu.core_type = #tpu.core_type<tc>, window_params = [{pipeline_mode = #tpu.pipeline_mode<synchronous>, transform_indices = @transform_0, window_bounds = array<i64: 2, 32, 256>}, {pipeline_mode = #tpu.pipeline_mode<synchronous>, transform_indices = @transform_1, window_bounds = array<i64: 32, 32>}, {pipeline_mode = #tpu.pipeline_mode<synchronous>, transform_indices = @transform_2, window_bounds = array<i64: 32, 1>}, {pipeline_mode = #tpu.pipeline_mode<synchronous>, transform_indices = @transform_3, window_bounds = array<i64: 32, 1>}, {pipeline_mode = #tpu.pipeline_mode<synchronous>, transform_indices = @transform_4, window_bounds = array<i64: 2, 32, 256>}]} {
    %cst = arith.constant 0.000000e+00 : f32
    %0 = vector.broadcast %cst : f32 to vector<32x1xf32>
    %cst_0 = arith.constant 0.000000e+00 : f32
    %1 = vector.broadcast %cst_0 : f32 to vector<32x1xf32>
    %c0 = arith.constant 0 : index
    %c0_1 = arith.constant 0 : index
    %2 = vector.load %arg2[%c0, %c0_1] : memref<32x32xf32, #tpu.memory_space<vmem>>, vector<32x32xf32>
    %c0_2 = arith.constant 0 : index
    %c0_3 = arith.constant 0 : index
    %c0_4 = arith.constant 0 : index
    %3 = vector.load %arg1[%c0_2, %c0_3, %c0_4] : memref<2x32x256xf32, #tpu.memory_space<vmem>>, vector<1x32x256xf32>
    %4 = vector.shape_cast %3 : vector<1x32x256xf32> to vector<32x256xf32>
    %cst_5 = arith.constant dense<0.000000e+00> : vector<32x256xf32>
    %5 = tpu.matmul %2, %4, %cst_5 {dimension_numbers = #tpu.dot_dimension_numbers<[1], [0], [0], [1], [0, 0, 1, 1], [], []>} : vector<32x32xf32>, vector<32x256xf32>, vector<32x256xf32> -> vector<32x256xf32>
    %c0_6 = arith.constant 0 : index
    %c0_7 = arith.constant 0 : index
    %c0_8 = arith.constant 0 : index
    %6 = vector.load %arg5[%c0_6, %c0_7, %c0_8] : memref<2x32x256xf32, #tpu.memory_space<vmem>>, vector<1x32x256xf32>
    %7 = vector.shape_cast %6 : vector<1x32x256xf32> to vector<32x256xf32>
    %8 = vector.shape_cast %5 : vector<32x256xf32> to vector<1x32x256xf32>
    tpu.vector_store %arg5[%c0_6, %c0_7, %c0_8], %8 {strides = array<i32>} : memref<2x32x256xf32, #tpu.memory_space<vmem>>, vector<1x32x256xf32>,
    %cst_9 = arith.constant dense<0.000000e+00> : vector<32xf32>
    %9 = vector.multi_reduction <add>, %5, %cst_9 [1] : vector<32x256xf32> to vector<32xf32>
    %10 = vector.shape_cast %9 : vector<32xf32> to vector<32x1xf32>
    %11 = arith.addf %0, %10 : vector<32x1xf32>
    %12 = arith.mulf %5, %5 : vector<32x256xf32>
    %cst_10 = arith.constant dense<0.000000e+00> : vector<32xf32>
    %13 = vector.multi_reduction <add>, %12, %cst_10 [1] : vector<32x256xf32> to vector<32xf32>
    %14 = vector.shape_cast %13 : vector<32xf32> to vector<32x1xf32>
    %15 = arith.addf %1, %14 : vector<32x1xf32>
    %c0_11 = arith.constant 0 : index
    %c0_12 = arith.constant 0 : index
    %16 = vector.load %arg2[%c0_11, %c0_12] : memref<32x32xf32, #tpu.memory_space<vmem>>, vector<32x32xf32>
    %c1 = arith.constant 1 : index
    %c0_13 = arith.constant 0 : index
    %c0_14 = arith.constant 0 : index
    %17 = vector.load %arg1[%c1, %c0_13, %c0_14] : memref<2x32x256xf32, #tpu.memory_space<vmem>>, vector<1x32x256xf32>
    %18 = vector.shape_cast %17 : vector<1x32x256xf32> to vector<32x256xf32>
    %cst_15 = arith.constant dense<0.000000e+00> : vector<32x256xf32>
    %19 = tpu.matmul %16, %18, %cst_15 {dimension_numbers = #tpu.dot_dimension_numbers<[1], [0], [0], [1], [0, 0, 1, 1], [], []>} : vector<32x32xf32>, vector<32x256xf32>, vector<32x256xf32> -> vector<32x256xf32>
    %c1_16 = arith.constant 1 : index
    %c0_17 = arith.constant 0 : index
    %c0_18 = arith.constant 0 : index
    %20 = vector.load %arg5[%c1_16, %c0_17, %c0_18] : memref<2x32x256xf32, #tpu.memory_space<vmem>>, vector<1x32x256xf32>
    %21 = vector.shape_cast %20 : vector<1x32x256xf32> to vector<32x256xf32>
    %22 = vector.shape_cast %19 : vector<32x256xf32> to vector<1x32x256xf32>
    tpu.vector_store %arg5[%c1_16, %c0_17, %c0_18], %22 {strides = array<i32>} : memref<2x32x256xf32, #tpu.memory_space<vmem>>, vector<1x32x256xf32>,
    %cst_19 = arith.constant dense<0.000000e+00> : vector<32xf32>
    %23 = vector.multi_reduction <add>, %19, %cst_19 [1] : vector<32x256xf32> to vector<32xf32>
    %24 = vector.shape_cast %23 : vector<32xf32> to vector<32x1xf32>
    %25 = arith.addf %11, %24 : vector<32x1xf32>
    %26 = arith.mulf %19, %19 : vector<32x256xf32>
    %cst_20 = arith.constant dense<0.000000e+00> : vector<32xf32>
    %27 = vector.multi_reduction <add>, %26, %cst_20 [1] : vector<32x256xf32> to vector<32xf32>
    %28 = vector.shape_cast %27 : vector<32xf32> to vector<32x1xf32>
    %29 = arith.addf %15, %28 : vector<32x1xf32>
    %cst_21 = arith.constant 0.001953125 : f32
    %30 = vector.broadcast %cst_21 : f32 to vector<32x1xf32>
    %31 = arith.mulf %25, %30 : vector<32x1xf32>
    %cst_22 = arith.constant 0.001953125 : f32
    %32 = vector.broadcast %cst_22 : f32 to vector<32x1xf32>
    %33 = arith.mulf %29, %32 : vector<32x1xf32>
    %34 = arith.mulf %31, %31 : vector<32x1xf32>
    %35 = arith.subf %33, %34 : vector<32x1xf32>
    %cst_23 = arith.constant 0.000000e+00 : f32
    %36 = vector.broadcast %cst_23 : f32 to vector<32x1xf32>
    %37 = arith.maximumf %35, %36 : vector<32x1xf32>
    %c0_24 = arith.constant 0 : index
    %c0_25 = arith.constant 0 : index
    %38 = vector.load %arg3[%c0_24, %c0_25] : memref<32x1xf32, #tpu.memory_space<vmem>>, vector<32x1xf32>
    %cst_26 = arith.constant 9.99999974E-6 : f32
    %39 = vector.broadcast %cst_26 : f32 to vector<32x1xf32>
    %40 = arith.addf %37, %39 : vector<32x1xf32>
    %41 = math.rsqrt %40 : vector<32x1xf32>
    %42 = arith.mulf %38, %41 : vector<32x1xf32>
    %c0_27 = arith.constant 0 : index
    %c0_28 = arith.constant 0 : index
    %43 = vector.load %arg4[%c0_27, %c0_28] : memref<32x1xf32, #tpu.memory_space<vmem>>, vector<32x1xf32>
    %44 = arith.mulf %31, %42 : vector<32x1xf32>
    %45 = arith.subf %43, %44 : vector<32x1xf32>
    %c0_29 = arith.constant 0 : index
    %c0_30 = arith.constant 0 : index
    %c0_31 = arith.constant 0 : index
    %46 = vector.load %arg5[%c0_29, %c0_30, %c0_31] : memref<2x32x256xf32, #tpu.memory_space<vmem>>, vector<1x32x256xf32>
    %47 = vector.shape_cast %46 : vector<1x32x256xf32> to vector<32x256xf32>
    %48 = vector.broadcast %42 : vector<32x1xf32> to vector<32x256xf32>
    %49 = arith.mulf %47, %48 : vector<32x256xf32>
    %50 = vector.broadcast %45 : vector<32x1xf32> to vector<32x256xf32>
    %51 = arith.addf %49, %50 : vector<32x256xf32>
    %c0_32 = arith.constant 0 : index
    %c0_33 = arith.constant 0 : index
    %c0_34 = arith.constant 0 : index
    %52 = vector.load %arg5[%c0_32, %c0_33, %c0_34] : memref<2x32x256xf32, #tpu.memory_space<vmem>>, vector<1x32x256xf32>
    %53 = vector.shape_cast %52 : vector<1x32x256xf32> to vector<32x256xf32>
    %54 = vector.shape_cast %51 : vector<32x256xf32> to vector<1x32x256xf32>
    tpu.vector_store %arg5[%c0_32, %c0_33, %c0_34], %54 {strides = array<i32>} : memref<2x32x256xf32, #tpu.memory_space<vmem>>, vector<1x32x256xf32>,
    %c1_35 = arith.constant 1 : index
    %c0_36 = arith.constant 0 : index
    %c0_37 = arith.constant 0 : index
    %55 = vector.load %arg5[%c1_35, %c0_36, %c0_37] : memref<2x32x256xf32, #tpu.memory_space<vmem>>, vector<1x32x256xf32>
    %56 = vector.shape_cast %55 : vector<1x32x256xf32> to vector<32x256xf32>
    %57 = vector.broadcast %42 : vector<32x1xf32> to vector<32x256xf32>
    %58 = arith.mulf %56, %57 : vector<32x256xf32>
    %59 = vector.broadcast %45 : vector<32x1xf32> to vector<32x256xf32>
    %60 = arith.addf %58, %59 : vector<32x256xf32>
    %c1_38 = arith.constant 1 : index
    %c0_39 = arith.constant 0 : index
    %c0_40 = arith.constant 0 : index
    %61 = vector.load %arg5[%c1_38, %c0_39, %c0_40] : memref<2x32x256xf32, #tpu.memory_space<vmem>>, vector<1x32x256xf32>
    %62 = vector.shape_cast %61 : vector<1x32x256xf32> to vector<32x256xf32>
    %63 = vector.shape_cast %60 : vector<32x256xf32> to vector<1x32x256xf32>
    tpu.vector_store %arg5[%c1_38, %c0_39, %c0_40], %63 {strides = array<i32>} : memref<2x32x256xf32, #tpu.memory_space<vmem>>, vector<1x32x256xf32>,
    return
  }
  func.func @transform_0(%arg0: i32) -> (i32, i32, i32) {
    %c0_i32 = arith.constant 0 : i32
    %c0_i32_0 = arith.constant 0 : i32
    %c0_i32_1 = arith.constant 0 : i32
    %c0_i32_2 = arith.constant 0 : i32
    return %c0_i32, %c0_i32_0, %c0_i32_1 : i32, i32, i32
  }
  func.func @transform_1(%arg0: i32) -> (i32, i32) {
    %c0_i32 = arith.constant 0 : i32
    %c0_i32_0 = arith.constant 0 : i32
    %c0_i32_1 = arith.constant 0 : i32
    return %c0_i32, %c0_i32_0 : i32, i32
  }
  func.func @transform_2(%arg0: i32) -> (i32, i32) {
    %c0_i32 = arith.constant 0 : i32
    %c0_i32_0 = arith.constant 0 : i32
    %c0_i32_1 = arith.constant 0 : i32
    return %c0_i32, %c0_i32_0 : i32, i32
  }
  func.func @transform_3(%arg0: i32) -> (i32, i32) {
    %c0_i32 = arith.constant 0 : i32
    %c0_i32_0 = arith.constant 0 : i32
    %c0_i32_1 = arith.constant 0 : i32
    return %c0_i32, %c0_i32_0 : i32, i32
  }
  func.func @transform_4(%arg0: i32) -> (i32, i32, i32) {
    %c0_i32 = arith.constant 0 : i32
    %c0_i32_0 = arith.constant 0 : i32
    %c0_i32_1 = arith.constant 0 : i32
    %c0_i32_2 = arith.constant 0 : i32
    return %c0_i32, %c0_i32_0, %c0_i32_1 : i32, i32, i32
  }
}

</mosaic_0001>

<llo_original>
// kernel: tpu_custom_call.1
$region0: #{tpu_custom_call.1}
  #allocation0 [shape = 'u32[]', space=smem, size = 0x4, offset = 0x4, fixed_abs, tag = 'smem constant byte address 0x4 - core index']
  #allocation1 [shape = 'u32[144,128]{1,0:T(1,128)}', space=vmem, size = 0x12000, scoped, tag = 'internal scratch']
  %s0 = inlined_call_operand.hbm [shape: f32[2,32,256], index: 0, kind: input, shape index: {}]
  %s1 = inlined_call_operand.vmem [shape: f32[32,32], index: 1, kind: input, shape index: {}]
  %s2 = inlined_call_operand.vmem [shape: f32[32,1], index: 2, kind: input, shape index: {}]
  %s3 = inlined_call_operand.vmem [shape: f32[32,1], index: 3, kind: input, shape index: {}]
  %s4 = inlined_call_operand.hbm [shape: f32[2,32,256], index: 4, kind: output, shape index: {}]
  %s5 = sld [smem:[#allocation0]]
  $region30: #{tpu_custom_call.1} parent=0
    _
  %s7 = ssub.s32 1, %s5
  %s8 = scalar_select 0, %s7, %s5
  $region1: #{tpu_custom_call.1} parent=0
    #allocation2 [shape = 'u8[65536]{0}', space=vmem, size = 0x10000, scoped, tag = 'input window, operand 0, single buffered']
    #allocation3 [shape = 's32[1]{0}', space=sflag, size = 0x4, scoped, tag = 'scoped memory for tpu_custom_call.1']
    #allocation4 [shape = 's32[1]{0}', space=sflag, size = 0x4, scoped, tag = 'scoped memory for tpu_custom_call.1']
    #allocation5 [shape = 'u8[65536]{0}', space=vmem, size = 0x10000, scoped, tag = 'output window, operand 0, single buffered']
    %9 = vsyncpa [#allocation3], 0
    %10 = vsyncpa [#allocation4], 0
    // Predicated region
    $region2: #{tpu_custom_call.1} parent=1 // pred_check
      _
    $region3: #{tpu_custom_call.1} parent=1 // pred_check_branch
      %12 = sbr.rel (0) target = $region5
    $region4: #{tpu_custom_call.1} parent=1 // pred_region
      %s14 = ssub.s32 2048, 2048
      %15 = vsyncadd [#allocation3], %s14
      %s16 = sshll.u32 [#allocation2], 4
      %s17 = int_to_ptr.vmem [resolvable:$true] %s16
      %22 = dma.hbm_to_vmem [thread:$0]  %s0, 2048, %s17, [#allocation3], 256, 256, 16
    $region5: #{tpu_custom_call.1} parent=1 // pred_fallthru
      _
    // Predicated region
    $region6: #{tpu_custom_call.1} parent=1 // pred_check
      _
    $region7: #{tpu_custom_call.1} parent=1 // pred_check_branch
      %24 = sbr.rel (0) target = $region9
    $region8: #{tpu_custom_call.1} parent=1 // pred_region
      _
    $region9: #{tpu_custom_call.1} parent=1 // pred_fallthru
      _
    // Predicated region
    $region10: #{tpu_custom_call.1} parent=1 // pred_check
      _
    $region11: #{tpu_custom_call.1} parent=1 // pred_check_branch
      %26 = sbr.rel (0) target = $region13
    $region12: #{tpu_custom_call.1} parent=1 // pred_region
      _
    $region13: #{tpu_custom_call.1} parent=1 // pred_fallthru
      _
    // Predicated region
    $region14: #{tpu_custom_call.1} parent=1 // pred_check
      _
    $region15: #{tpu_custom_call.1} parent=1 // pred_check_branch
      %28 = sbr.rel (0) target = $region17
    $region16: #{tpu_custom_call.1} parent=1 // pred_region
      _
    $region17: #{tpu_custom_call.1} parent=1 // pred_fallthru
      _
    // Predicated region
    $region18: #{tpu_custom_call.1} parent=1 // pred_check
      _
    $region19: #{tpu_custom_call.1} parent=1 // pred_check_branch
      %30 = sbr.rel (0) target = $region21
    $region20: #{tpu_custom_call.1} parent=1 // pred_region
      %31 = dma.done [#allocation3], 2048
    $region21: #{tpu_custom_call.1} parent=1 // pred_fallthru
      _
    %v32 = vld [vmem:[%s1] sm:$0xff]
    %v33 = vld [vmem:[%s1 + $0x8] sm:$0xff]
    %v34 = vld [vmem:[%s1 + $0x10] sm:$0xff]
    %v35 = vld [vmem:[%s1 + $0x18] sm:$0xff]
    %v36 = vld [vmem:[#allocation2] sm:$0xff]
    %v37 = vld [vmem:[#allocation2 + $0x8] sm:$0xff]
    %v38 = vld [vmem:[#allocation2 + $0x10] sm:$0xff]
    %v39 = vld [vmem:[#allocation2 + $0x18] sm:$0xff]
    %v40 = vld [vmem:[#allocation2 + $0x20] sm:$0xff]
    %v41 = vld [vmem:[#allocation2 + $0x28] sm:$0xff]
    %v42 = vld [vmem:[#allocation2 + $0x30] sm:$0xff]
    %v43 = vld [vmem:[#allocation2 + $0x38] sm:$0xff]
    %vm44 = vcmask 261120
    %v46 = vsel %vm44, %v32, 0
    %v49 = vsel %vm44, %v33, 0
    %v52 = vsel %vm44, %v34, 0
    %v55 = vsel %vm44, %v35, 0
    %57 = vmatprep.subr.mxu0 %v37
    %58 = vmatpush1.msra.mxu0 %v36
    %59 = vmatprep.subr.mxu0 %v39
    %60 = vmatpush1.msra.mxu0 %v38
    %61 = vmatprep.subr.mxu0 %v41
    %62 = vmatpush1.msra.mxu0 %v40
    %63 = vmatprep.subr.mxu0 %v43
    %64 = vmatpush1.msra.mxu0 %v42
    %65 = vmatprep.subr.mxu0 0.0
    %66 = vmatpush1.msra.mxu0 0.0
    %67 = vmatprep.subr.mxu0 0.0
    %68 = vmatpush1.msra.mxu0 0.0
    %69 = vmatprep.subr.mxu0 0.0
    %70 = vmatpush1.msra.mxu0 0.0
    %71 = vmatprep.subr.mxu0 0.0
    %72 = vmatpush1.msra.mxu0 0.0
    %73 = vmatprep.subr.mxu0 0.0
    %74 = vmatpush1.msra.mxu0 0.0
    %75 = vmatprep.subr.mxu0 0.0
    %76 = vmatpush1.msra.mxu0 0.0
    %77 = vmatprep.subr.mxu0 0.0
    %78 = vmatpush1.msra.mxu0 0.0
    %79 = vmatprep.subr.mxu0 0.0
    %80 = vmatpush1.msra.mxu0 0.0
    %81 = vmatprep.subr.mxu0 0.0
    %82 = vmatpush1.msra.mxu0 0.0
    %83 = vmatprep.subr.mxu0 0.0
    %84 = vmatpush1.msra.mxu0 0.0
    %85 = vmatprep.subr.mxu0 0.0
    %86 = vmatpush1.msra.mxu0 0.0
    %87 = vmatprep.subr.mxu0 0.0
    %88 = vmatpush1.msra.mxu0 0.0
    %89 = vmatprep.subr.mxu0 0.0
    %90 = vmatpush1.msra.mxu0 0.0
    %91 = vmatprep.subr.mxu0 0.0
    %92 = vmatpush1.msra.mxu0 0.0
    %93 = vmatprep.subr.mxu0 0.0
    %94 = vmatpush1.msra.mxu0 0.0
    %95 = vmatprep.subr.mxu0 0.0
    %96 = vmatpush1.msra.mxu0 0.0
    %97 = vmatprep.subr.mxu0 0.0
    %98 = vmatpush1.msra.mxu0 0.0
    %99 = vmatprep.subr.mxu0 0.0
    %100 = vmatpush1.msra.mxu0 0.0
    %101 = vmatprep.subr.mxu0 0.0
    %102 = vmatpush1.msra.mxu0 0.0
    %103 = vmatprep.subr.mxu0 0.0
    %104 = vmatpush1.msra.mxu0 0.0
    %105 = vmatprep.subr.mxu0 0.0
    %106 = vmatpush1.msra.mxu0 0.0
    %107 = vmatprep.subr.mxu0 0.0
    %108 = vmatpush1.msra.mxu0 0.0
    %109 = vmatprep.subr.mxu0 0.0
    %110 = vmatpush1.msra.mxu0 0.0
    %111 = vmatprep.subr.mxu0 0.0
    %112 = vmatpush1.msra.mxu0 0.0
    %113 = vmatprep.subr.mxu0 0.0
    %114 = vmatpush1.msra.mxu0 0.0
    %115 = vmatprep.subr.mxu0 0.0
    %116 = vmatpush1.msra.mxu0 0.0
    %117 = vmatprep.subr.mxu0 0.0
    %118 = vmatpush1.msra.mxu0 0.0
    %119 = vmatprep.subr.mxu0 0.0
    %120 = vmatpush1.msra.mxu0 0.0
    %121 = vmatprep.mubr.f32.mxu0 0.0
    %122 = vmatmul.mubr.f32.gmra.mrb[0].mxu0 %v46
    %v123 = vpop.f32.mrb[0].mxu0
    %v124 = vadd.f32 0.0, %v123
    %v125 = vpop.f32.mrb[0].mxu0
    %v126 = vadd.f32 0.0, %v125
    %127 = vmatprep.mubr.f32.mxu0 0.0
    %128 = vmatmul.mubr.f32.gmra.mrb[0].mxu0 %v49
    %v129 = vpop.f32.mrb[0].mxu0
    %v130 = vadd.f32 0.0, %v129
    %v131 = vpop.f32.mrb[0].mxu0
    %v132 = vadd.f32 0.0, %v131
    %133 = vmatprep.mubr.f32.mxu0 0.0
    %134 = vmatmul.mubr.f32.gmra.mrb[0].mxu0 %v52
    %v135 = vpop.f32.mrb[0].mxu0
    %v136 = vadd.f32 0.0, %v135
    %v137 = vpop.f32.mrb[0].mxu0
    %v138 = vadd.f32 0.0, %v137
    %139 = vmatprep.mubr.f32.mxu0 0.0
    %140 = vmatmul.mubr.f32.gmra.mrb[0].mxu0 %v55
    %v141 = vpop.f32.mrb[0].mxu0
    %v142 = vadd.f32 0.0, %v141
    %v143 = vpop.f32.mrb[0].mxu0
    %v144 = vadd.f32 0.0, %v143
    %145 = vdwg.mxu0
    %146 = vst [vmem:[#allocation5] sm:$0xff] %v124
    %147 = vst [vmem:[#allocation5 + $0x8] sm:$0xff] %v126
    %148 = vst [vmem:[#allocation5 + $0x10] sm:$0xff] %v130
    %149 = vst [vmem:[#allocation5 + $0x18] sm:$0xff] %v132
    %150 = vst [vmem:[#allocation5 + $0x20] sm:$0xff] %v136
    %151 = vst [vmem:[#allocation5 + $0x28] sm:$0xff] %v138
    %152 = vst [vmem:[#allocation5 + $0x30] sm:$0xff] %v142
    %153 = vst [vmem:[#allocation5 + $0x38] sm:$0xff] %v144
    %v154 = vadd.f32 %v124, %v126
    %155 = vadd.xlane.f32.xlu0 %v154
    %v156 = vpop.xlane.xlu0 %155
    %v157 = vadd.f32 %v130, %v132
    %158 = vadd.xlane.f32.xlu0 %v157
    %v159 = vpop.xlane.xlu0 %158
    %v160 = vadd.f32 %v136, %v138
    %161 = vadd.xlane.f32.xlu0 %v160
    %v162 = vpop.xlane.xlu0 %161
    %v163 = vadd.f32 %v142, %v144
    %164 = vadd.xlane.f32.xlu0 %v163
    %v165 = vpop.xlane.xlu0 %164
    %v166 = vadd.f32 %v156, 0.0
    %v167 = vadd.f32 %v159, 0.0
    %v168 = vadd.f32 %v162, 0.0
    %v169 = vadd.f32 %v165, 0.0
    %v170 = vmul.f32 %v124, %v124
    %v171 = vmul.f32 %v126, %v126
    %v172 = vmul.f32 %v130, %v130
    %v173 = vmul.f32 %v132, %v132
    %v174 = vmul.f32 %v136, %v136
    %v175 = vmul.f32 %v138, %v138
    %v176 = vmul.f32 %v142, %v142
    %v177 = vmul.f32 %v144, %v144
    %v178 = vadd.f32 %v170, %v171
    %179 = vadd.xlane.f32.xlu0 %v178
    %v180 = vpop.xlane.xlu0 %179
    %v181 = vadd.f32 %v172, %v173
    %182 = vadd.xlane.f32.xlu0 %v181
    %v183 = vpop.xlane.xlu0 %182
    %v184 = vadd.f32 %v174, %v175
    %185 = vadd.xlane.f32.xlu0 %v184
    %v186 = vpop.xlane.xlu0 %185
    %v187 = vadd.f32 %v176, %v177
    %188 = vadd.xlane.f32.xlu0 %v187
    %v189 = vpop.xlane.xlu0 %188
    %v190 = vadd.f32 %v180, 0.0
    %v191 = vadd.f32 %v183, 0.0
    %v192 = vadd.f32 %v186, 0.0
    %v193 = vadd.f32 %v189, 0.0
    %v194 = vld [vmem:[%s1] sm:$0xff]
    %v195 = vld [vmem:[%s1 + $0x8] sm:$0xff]
    %v196 = vld [vmem:[%s1 + $0x10] sm:$0xff]
    %v197 = vld [vmem:[%s1 + $0x18] sm:$0xff]
    %s198 = scalar_lea.vmem [#allocation2], 64
    %v199 = vld [vmem:[%s198] sm:$0xff]
    %v200 = vld [vmem:[%s198 + $0x8] sm:$0xff]
    %v201 = vld [vmem:[%s198 + $0x10] sm:$0xff]
    %v202 = vld [vmem:[%s198 + $0x18] sm:$0xff]
    %v203 = vld [vmem:[%s198 + $0x20] sm:$0xff]
    %v204 = vld [vmem:[%s198 + $0x28] sm:$0xff]
    %v205 = vld [vmem:[%s198 + $0x30] sm:$0xff]
    %v206 = vld [vmem:[%s198 + $0x38] sm:$0xff]
    %v208 = vsel %vm44, %v194, 0
    %v211 = vsel %vm44, %v195, 0
    %v214 = vsel %vm44, %v196, 0
    %v217 = vsel %vm44, %v197, 0
    %219 = vmatprep.subr.mxu0 %v200
    %220 = vmatpush1.msra.mxu0 %v199
    %221 = vmatprep.subr.mxu0 %v202
    %222 = vmatpush1.msra.mxu0 %v201
    %223 = vmatprep.subr.mxu0 %v204
    %224 = vmatpush1.msra.mxu0 %v203
    %225 = vmatprep.subr.mxu0 %v206
    %226 = vmatpush1.msra.mxu0 %v205
    %227 = vmatprep.subr.mxu0 0.0
    %228 = vmatpush1.msra.mxu0 0.0
    %229 = vmatprep.subr.mxu0 0.0
    %230 = vmatpush1.msra.mxu0 0.0
    %231 = vmatprep.subr.mxu0 0.0
    %232 = vmatpush1.msra.mxu0 0.0
    %233 = vmatprep.subr.mxu0 0.0
    %234 = vmatpush1.msra.mxu0 0.0
    %235 = vmatprep.subr.mxu0 0.0
    %236 = vmatpush1.msra.mxu0 0.0
    %237 = vmatprep.subr.mxu0 0.0
    %238 = vmatpush1.msra.mxu0 0.0
    %239 = vmatprep.subr.mxu0 0.0
    %240 = vmatpush1.msra.mxu0 0.0
    %241 = vmatprep.subr.mxu0 0.0
    %242 = vmatpush1.msra.mxu0 0.0
    %243 = vmatprep.subr.mxu0 0.0
    %244 = vmatpush1.msra.mxu0 0.0
    %245 = vmatprep.subr.mxu0 0.0
    %246 = vmatpush1.msra.mxu0 0.0
    %247 = vmatprep.subr.mxu0 0.0
    %248 = vmatpush1.msra.mxu0 0.0
    %249 = vmatprep.subr.mxu0 0.0
    %250 = vmatpush1.msra.mxu0 0.0
    %251 = vmatprep.subr.mxu0 0.0
    %252 = vmatpush1.msra.mxu0 0.0
    %253 = vmatprep.subr.mxu0 0.0
    %254 = vmatpush1.msra.mxu0 0.0
    %255 = vmatprep.subr.mxu0 0.0
    %256 = vmatpush1.msra.mxu0 0.0
    %257 = vmatprep.subr.mxu0 0.0
    %258 = vmatpush1.msra.mxu0 0.0
    %259 = vmatprep.subr.mxu0 0.0
    %260 = vmatpush1.msra.mxu0 0.0
    %261 = vmatprep.subr.mxu0 0.0
    %262 = vmatpush1.msra.mxu0 0.0
    %263 = vmatprep.subr.mxu0 0.0
    %264 = vmatpush1.msra.mxu0 0.0
    %265 = vmatprep.subr.mxu0 0.0
    %266 = vmatpush1.msra.mxu0 0.0
    %267 = vmatprep.subr.mxu0 0.0
    %268 = vmatpush1.msra.mxu0 0.0
    %269 = vmatprep.subr.mxu0 0.0
    %270 = vmatpush1.msra.mxu0 0.0
    %271 = vmatprep.subr.mxu0 0.0
    %272 = vmatpush1.msra.mxu0 0.0
    %273 = vmatprep.subr.mxu0 0.0
    %274 = vmatpush1.msra.mxu0 0.0
    %275 = vmatprep.subr.mxu0 0.0
    %276 = vmatpush1.msra.mxu0 0.0
    %277 = vmatprep.subr.mxu0 0.0
    %278 = vmatpush1.msra.mxu0 0.0
    %279 = vmatprep.subr.mxu0 0.0
    %280 = vmatpush1.msra.mxu0 0.0
    %281 = vmatprep.subr.mxu0 0.0
    %282 = vmatpush1.msra.mxu0 0.0
    %283 = vmatprep.mubr.f32.mxu0 0.0
    %284 = vmatmul.mubr.f32.gmra.mrb[0].mxu0 %v208
    %v285 = vpop.f32.mrb[0].mxu0
    %v286 = vadd.f32 0.0, %v285
    %v287 = vpop.f32.mrb[0].mxu0
    %v288 = vadd.f32 0.0, %v287
    %289 = vmatprep.mubr.f32.mxu0 0.0
    %290 = vmatmul.mubr.f32.gmra.mrb[0].mxu0 %v211
    %v291 = vpop.f32.mrb[0].mxu0
    %v292 = vadd.f32 0.0, %v291
    %v293 = vpop.f32.mrb[0].mxu0
    %v294 = vadd.f32 0.0, %v293
    %295 = vmatprep.mubr.f32.mxu0 0.0
    %296 = vmatmul.mubr.f32.gmra.mrb[0].mxu0 %v214
    %v297 = vpop.f32.mrb[0].mxu0
    %v298 = vadd.f32 0.0, %v297
    %v299 = vpop.f32.mrb[0].mxu0
    %v300 = vadd.f32 0.0, %v299
    %301 = vmatprep.mubr.f32.mxu0 0.0
    %302 = vmatmul.mubr.f32.gmra.mrb[0].mxu0 %v217
    %v303 = vpop.f32.mrb[0].mxu0
    %v304 = vadd.f32 0.0, %v303
    %v305 = vpop.f32.mrb[0].mxu0
    %v306 = vadd.f32 0.0, %v305
    %307 = vdwg.mxu0
    %s308 = scalar_lea.vmem [#allocation5], 64
    %309 = vst [vmem:[%s308] sm:$0xff] %v286
    %310 = vst [vmem:[%s308 + $0x8] sm:$0xff] %v288
    %311 = vst [vmem:[%s308 + $0x10] sm:$0xff] %v292
    %312 = vst [vmem:[%s308 + $0x18] sm:$0xff] %v294
    %313 = vst [vmem:[%s308 + $0x20] sm:$0xff] %v298
    %314 = vst [vmem:[%s308 + $0x28] sm:$0xff] %v300
    %315 = vst [vmem:[%s308 + $0x30] sm:$0xff] %v304
    %316 = vst [vmem:[%s308 + $0x38] sm:$0xff] %v306
    %v317 = vadd.f32 %v286, %v288
    %318 = vadd.xlane.f32.xlu0 %v317
    %v319 = vpop.xlane.xlu0 %318
    %v320 = vadd.f32 %v292, %v294
    %321 = vadd.xlane.f32.xlu0 %v320
    %v322 = vpop.xlane.xlu0 %321
    %v323 = vadd.f32 %v298, %v300
    %324 = vadd.xlane.f32.xlu0 %v323
    %v325 = vpop.xlane.xlu0 %324
    %v326 = vadd.f32 %v304, %v306
    %327 = vadd.xlane.f32.xlu0 %v326
    %v328 = vpop.xlane.xlu0 %327
    %v329 = vadd.f32 %v166, %v319
    %v330 = vadd.f32 %v167, %v322
    %v331 = vadd.f32 %v168, %v325
    %v332 = vadd.f32 %v169, %v328
    %v333 = vmul.f32 %v286, %v286
    %v334 = vmul.f32 %v288, %v288
    %v335 = vmul.f32 %v292, %v292
    %v336 = vmul.f32 %v294, %v294
    %v337 = vmul.f32 %v298, %v298
    %v338 = vmul.f32 %v300, %v300
    %v339 = vmul.f32 %v304, %v304
    %v340 = vmul.f32 %v306, %v306
    %v341 = vadd.f32 %v333, %v334
    %342 = vadd.xlane.f32.xlu0 %v341
    %v343 = vpop.xlane.xlu0 %342
    %v344 = vadd.f32 %v335, %v336
    %345 = vadd.xlane.f32.xlu0 %v344
    %v346 = vpop.xlane.xlu0 %345
    %v347 = vadd.f32 %v337, %v338
    %348 = vadd.xlane.f32.xlu0 %v347
    %v349 = vpop.xlane.xlu0 %348
    %v350 = vadd.f32 %v339, %v340
    %351 = vadd.xlane.f32.xlu0 %v350
    %v352 = vpop.xlane.xlu0 %351
    %v353 = vadd.f32 %v190, %v343
    %v354 = vadd.f32 %v191, %v346
    %v355 = vadd.f32 %v192, %v349
    %v356 = vadd.f32 %v193, %v352
    %v357 = vmul.f32 %v329, 0.001953125
    %v358 = vmul.f32 %v330, 0.001953125
    %v359 = vmul.f32 %v331, 0.001953125
    %v360 = vmul.f32 %v332, 0.001953125
    %v361 = vmul.f32 %v353, 0.001953125
    %v362 = vmul.f32 %v354, 0.001953125
    %v363 = vmul.f32 %v355, 0.001953125
    %v364 = vmul.f32 %v356, 0.001953125
    %v365 = vmul.f32 %v357, %v357
    %v366 = vmul.f32 %v358, %v358
    %v367 = vmul.f32 %v359, %v359
    %v368 = vmul.f32 %v360, %v360
    %v369 = vsub.f32 %v361, %v365
    %v370 = vsub.f32 %v362, %v366
    %v371 = vsub.f32 %v363, %v367
    %v372 = vsub.f32 %v364, %v368
    %v373 = vmax.f32 %v369, 0.0
    %v374 = vmax.f32 %v370, 0.0
    %v375 = vmax.f32 %v371, 0.0
    %v376 = vmax.f32 %v372, 0.0
    %v377 = vld [vmem:[%s2] sm:$0xff]
    %v378 = vld [vmem:[%s2 + $0x8] sm:$0xff]
    %v379 = vld [vmem:[%s2 + $0x10] sm:$0xff]
    %v380 = vld [vmem:[%s2 + $0x18] sm:$0xff]
    %v381 = vadd.f32 %v373, 1e-05
    %v382 = vadd.f32 %v374, 1e-05
    %v383 = vadd.f32 %v375, 1e-05
    %v384 = vadd.f32 %v376, 1e-05
    %v385 = vrsqrt.pop %v381
    %v386 = vrsqrt.pop %v382
    %v387 = vrsqrt.pop %v383
    %v388 = vrsqrt.pop %v384
    %v389 = vmul.f32 %v377, %v385
    %v390 = vmul.f32 %v378, %v386
    %v391 = vmul.f32 %v379, %v387
    %v392 = vmul.f32 %v380, %v388
    %v393 = vld [vmem:[%s3] sm:$0xff]
    %v394 = vld [vmem:[%s3 + $0x8] sm:$0xff]
    %v395 = vld [vmem:[%s3 + $0x10] sm:$0xff]
    %v396 = vld [vmem:[%s3 + $0x18] sm:$0xff]
    %v397 = vmul.f32 %v357, %v389
    %v398 = vmul.f32 %v358, %v390
    %v399 = vmul.f32 %v359, %v391
    %v400 = vmul.f32 %v360, %v392
    %v401 = vsub.f32 %v393, %v397
    %v402 = vsub.f32 %v394, %v398
    %v403 = vsub.f32 %v395, %v399
    %v404 = vsub.f32 %v396, %v400
    %v405 = vld [vmem:[#allocation5] sm:$0xff]
    %v406 = vld [vmem:[#allocation5 + $0x8] sm:$0xff]
    %v407 = vld [vmem:[#allocation5 + $0x10] sm:$0xff]
    %v408 = vld [vmem:[#allocation5 + $0x18] sm:$0xff]
    %v409 = vld [vmem:[#allocation5 + $0x20] sm:$0xff]
    %v410 = vld [vmem:[#allocation5 + $0x28] sm:$0xff]
    %v411 = vld [vmem:[#allocation5 + $0x30] sm:$0xff]
    %v412 = vld [vmem:[#allocation5 + $0x38] sm:$0xff]
    %414 = vset.pattern.permute.xlu0 0
    %415 = vperm.xlu0 %414, %v389
    %v416 = vpop.permute.xlu0 %415
    %419 = vset.pattern.permute.xlu0 0
    %420 = vperm.xlu0 %419, %v390
    %v421 = vpop.permute.xlu0 %420
    %424 = vset.pattern.permute.xlu0 0
    %425 = vperm.xlu0 %424, %v391
    %v426 = vpop.permute.xlu0 %425
    %429 = vset.pattern.permute.xlu0 0
    %430 = vperm.xlu0 %429, %v392
    %v431 = vpop.permute.xlu0 %430
    %v433 = vmul.f32 %v405, %v416
    %v434 = vmul.f32 %v406, %v416
    %v435 = vmul.f32 %v407, %v421
    %v436 = vmul.f32 %v408, %v421
    %v437 = vmul.f32 %v409, %v426
    %v438 = vmul.f32 %v410, %v426
    %v439 = vmul.f32 %v411, %v431
    %v440 = vmul.f32 %v412, %v431
    %442 = vset.pattern.permute.xlu0 0
    %443 = vperm.xlu0 %442, %v401
    %v444 = vpop.permute.xlu0 %443
    %447 = vset.pattern.permute.xlu0 0
    %448 = vperm.xlu0 %447, %v402
    %v449 = vpop.permute.xlu0 %448
    %452 = vset.pattern.permute.xlu0 0
    %453 = vperm.xlu0 %452, %v403
    %v454 = vpop.permute.xlu0 %453
    %457 = vset.pattern.permute.xlu0 0
    %458 = vperm.xlu0 %457, %v404
    %v459 = vpop.permute.xlu0 %458
    %v461 = vadd.f32 %v433, %v444
    %v462 = vadd.f32 %v434, %v444
    %v463 = vadd.f32 %v435, %v449
    %v464 = vadd.f32 %v436, %v449
    %v465 = vadd.f32 %v437, %v454
    %v466 = vadd.f32 %v438, %v454
    %v467 = vadd.f32 %v439, %v459
    %v468 = vadd.f32 %v440, %v459
    %469 = vst [vmem:[#allocation5] sm:$0xff] %v461
    %470 = vst [vmem:[#allocation5 + $0x8] sm:$0xff] %v462
    %471 = vst [vmem:[#allocation5 + $0x10] sm:$0xff] %v463
    %472 = vst [vmem:[#allocation5 + $0x18] sm:$0xff] %v464
    %473 = vst [vmem:[#allocation5 + $0x20] sm:$0xff] %v465
    %474 = vst [vmem:[#allocation5 + $0x28] sm:$0xff] %v466
    %475 = vst [vmem:[#allocation5 + $0x30] sm:$0xff] %v467
    %476 = vst [vmem:[#allocation5 + $0x38] sm:$0xff] %v468
    %v477 = vld [vmem:[%s308] sm:$0xff]
    %v478 = vld [vmem:[%s308 + $0x8] sm:$0xff]
    %v479 = vld [vmem:[%s308 + $0x10] sm:$0xff]
    %v480 = vld [vmem:[%s308 + $0x18] sm:$0xff]
    %v481 = vld [vmem:[%s308 + $0x20] sm:$0xff]
    %v482 = vld [vmem:[%s308 + $0x28] sm:$0xff]
    %v483 = vld [vmem:[%s308 + $0x30] sm:$0xff]
    %v484 = vld [vmem:[%s308 + $0x38] sm:$0xff]
    %v485 = vmul.f32 %v477, %v416
    %v486 = vmul.f32 %v478, %v416
    %v487 = vmul.f32 %v479, %v421
    %v488 = vmul.f32 %v480, %v421
    %v489 = vmul.f32 %v481, %v426
    %v490 = vmul.f32 %v482, %v426
    %v491 = vmul.f32 %v483, %v431
    %v492 = vmul.f32 %v484, %v431
    %v493 = vadd.f32 %v485, %v444
    %v494 = vadd.f32 %v486, %v444
    %v495 = vadd.f32 %v487, %v449
    %v496 = vadd.f32 %v488, %v449
    %v497 = vadd.f32 %v489, %v454
    %v498 = vadd.f32 %v490, %v454
    %v499 = vadd.f32 %v491, %v459
    %v500 = vadd.f32 %v492, %v459
    %501 = vst [vmem:[%s308] sm:$0xff] %v493
    %502 = vst [vmem:[%s308 + $0x8] sm:$0xff] %v494
    %503 = vst [vmem:[%s308 + $0x10] sm:$0xff] %v495
    %504 = vst [vmem:[%s308 + $0x18] sm:$0xff] %v496
    %505 = vst [vmem:[%s308 + $0x20] sm:$0xff] %v497
    %506 = vst [vmem:[%s308 + $0x28] sm:$0xff] %v498
    %507 = vst [vmem:[%s308 + $0x30] sm:$0xff] %v499
    %508 = vst [vmem:[%s308 + $0x38] sm:$0xff] %v500
    // Predicated region
    $region22: #{tpu_custom_call.1} parent=1 // pred_check
      _
    $region23: #{tpu_custom_call.1} parent=1 // pred_check_branch
      %510 = sbr.rel (0) target = $region25
    $region24: #{tpu_custom_call.1} parent=1 // pred_region
      %s512 = ssub.s32 2048, 2048
      %513 = vsyncadd [#allocation4], %s512
      %s514 = sshll.u32 [#allocation5], 4
      %s515 = int_to_ptr.vmem [resolvable:$true] %s514
      %520 = dma.vmem_to_hbm [thread:$0]  %s515, 2048, %s4, [#allocation4], 256, 256, 16
    $region25: #{tpu_custom_call.1} parent=1 // pred_fallthru
      _
    // Predicated region
    $region26: #{tpu_custom_call.1} parent=1 // pred_check
      _
    $region27: #{tpu_custom_call.1} parent=1 // pred_check_branch
      %522 = sbr.rel (0) target = $region29
    $region28: #{tpu_custom_call.1} parent=1 // pred_region
      %523 = dma.done [#allocation4], 2048
    $region29: #{tpu_custom_call.1} parent=1 // pred_fallthru
      _
    %524 = vsyncpa [#allocation3], 1
    %525 = vsyncpa [#allocation4], 1

</llo_original>
